<compile_context>
chip_gen: v6e
topology: v6e:2x2x1
jax: 0.10.0
libtpu: 0.0.40
codegen_flags: <defaults>
</compile_context>

<pallas_src>
import functools

import jax
import jax.numpy as jnp
from jax.experimental import pallas as pl
from jax.experimental.pallas import tpu as pltpu


def _round_up(a, b):
    return -(-a // b) * b


def _cdiv(a, b):
    return -(-a // b)


def _vmem_budget_bytes():
    """~75% of per-core VMEM (96 MiB on v5e/v6e, 48 MiB on v7x), capped at 112 MiB."""
    cap = 64 * 1024 * 1024
    try:
        info = pltpu.get_tpu_info()
        got = getattr(info, "vmem_capacity_bytes", None)
        if got:
            cap = int(got)
    except Exception:
        pass
    return min(int(cap * 0.75), 112 * 1024 * 1024)


def _blackbox_kernel_resident(x_ref, wr_ref, ws_ref, wd_ref, o_ref, *, compute_dtype):
    """Single-K path: weights VMEM-resident, no accumulator scratch."""
    x = x_ref[...].astype(jnp.float32)
    px = jnp.pi * x
    c = jnp.cos(px)
    s = jnp.sin(px)
    m1 = jnp.dot((c + s).astype(compute_dtype), wr_ref[...],
                 preferred_element_type=jnp.float32)
    m2 = jnp.dot(s.astype(compute_dtype), ws_ref[...],
                 preferred_element_type=jnp.float32)
    m3 = jnp.dot(c.astype(compute_dtype), wd_ref[...],
                 preferred_element_type=jnp.float32)
    yr = m1 - m2
    yi = m1 + m3
    p = yr * yr + yi * yi
    # Exact row max: the whole (zero-padded) OUT row lives in this block and
    # padded columns carry zero weights, so p == 0 there and never wins (p >= 0).
    row_max = jnp.maximum(jnp.max(p, axis=1, keepdims=True), jnp.float32(1e-30))
    o_ref[...] = (p * pl.reciprocal(row_max)).astype(o_ref.dtype)


def _blackbox_kernel_tiled(x_ref, wr_ref, ws_ref, wd_ref, o_ref, yr_acc, yi_acc, *,
                           compute_dtype):
    """(m, k) grid, K last: f32 accumulators, init/finalize gated with pl.when."""
    k = pl.program_id(1)

    @pl.when(k == 0)
    def _init():
        yr_acc[...] = jnp.zeros_like(yr_acc)
        yi_acc[...] = jnp.zeros_like(yi_acc)

    x = x_ref[...].astype(jnp.float32)
    px = jnp.pi * x
    c = jnp.cos(px)
    s = jnp.sin(px)
    m1 = jnp.dot((c + s).astype(compute_dtype), wr_ref[...],
                 preferred_element_type=jnp.float32)
    m2 = jnp.dot(s.astype(compute_dtype), ws_ref[...],
                 preferred_element_type=jnp.float32)
    m3 = jnp.dot(c.astype(compute_dtype), wd_ref[...],
                 preferred_element_type=jnp.float32)
    yr_acc[...] += m1 - m2
    yi_acc[...] += m1 + m3

    @pl.when(k == pl.num_programs(1) - 1)
    def _finalize():
        yr = yr_acc[...]
        yi = yi_acc[...]
        p = yr * yr + yi * yi
        row_max = jnp.maximum(jnp.max(p, axis=1, keepdims=True), jnp.float32(1e-30))
        o_ref[...] = (p * pl.reciprocal(row_max)).astype(o_ref.dtype)


def make_blackbox_forward(tm_real, tm_imag, *, compute_dtype=jnp.bfloat16,
                          block_m=None, block_k=None):
    """Build forward(x) for the Blackbox layer.

    Pads/casts/combines the transmission matrix exactly once (hoisted out of the
    per-call forward path) and plans tiles from the per-generation VMEM budget.
    """
    IN, OUT = tm_real.shape
    assert tm_imag.shape == (IN, OUT)
    f32 = jnp.float32
    w_item = jnp.dtype(compute_dtype).itemsize

    out_p = _round_up(OUT, 128)
    in_full = _round_up(IN, 128)
    vmem_budget = _vmem_budget_bytes()

    # --- pick bk: largest lane-aligned K tile whose three (conservatively
    # double-buffered) bf16 weight tiles fit ~45% of the VMEM budget. If the
    # whole padded K dimension fits, we run the resident single-K path and the
    # weights are DMAed exactly once for the whole grid.
    if block_k is not None:
        bk = _round_up(min(block_k, in_full), 128)
    else:
        bk = 128
        w_tile_budget = int(vmem_budget * 0.45)
        for cand in (in_full, 2048, 1024, 512, 256, 128):
            if cand <= in_full and 2 * 3 * cand * out_p * w_item <= w_tile_budget:
                bk = cand
                break
    in_p = _round_up(IN, bk)
    grid_k = in_p // bk
    single_k = grid_k == 1
    if single_k:
        bk = in_p

    # --- one-time weight prep: pad, form Gauss combinations, cast to bf16.
    wr = jnp.pad(jnp.asarray(tm_real, f32), ((0, in_p - IN), (0, out_p - OUT)))
    wi = jnp.pad(jnp.asarray(tm_imag, f32), ((0, in_p - IN), (0, out_p - OUT)))
    wr_c = wr.astype(compute_dtype)                 # for m1 = (c+s) @ wr
    ws_c = (wr + wi).astype(compute_dtype)          # for m2 = s @ (wr + wi)
    wd_c = (wi - wr).astype(compute_dtype)          # for m3 = c @ (wi - wr)

    # --- largest batch tile that fits the remaining VMEM budget (cap 512).
    w_tile_bytes = 2 * 3 * bk * out_p * w_item      # conservative: 2 buffers each
    remaining = max(vmem_budget - w_tile_bytes, 8 * 1024)
    per_row = 2 * bk * 4 + 2 * out_p * 4 + (0 if single_k else 2 * out_p * 4)
    bm_fit = max(8, min(512, (remaining // per_row) // 8 * 8))
    bm_cap = 512 if block_m is None else max(8, _round_up(block_m, 8))

    # TODO(synk): for very large OUT (un-tiled OUT block exceeding the VMEM
    # budget, esp. on v7x's 64 MiB), tile OUT and do a two-phase row-max.

    kernel_res = functools.partial(_blackbox_kernel_resident, compute_dtype=compute_dtype)
    kernel_til = functools.partial(_blackbox_kernel_tiled, compute_dtype=compute_dtype)

    def forward(x):
        assert x.ndim == 2 and x.shape[1] == IN, "x must be (batch, in_features)"
        B = x.shape[0]
        b_min = _round_up(B, 8)
        bm = max(8, (min(bm_cap, bm_fit, b_min) // 8) * 8)
        # v7x megacore: in the resident path (no weight re-streaming cost) split a
        # lone batch tile so both TensorCores get work.
        if single_k and b_min >= 16 and _cdiv(b_min, bm) == 1:
            bm = max(8, _round_up(_cdiv(b_min, 2), 8))
        b_p = _round_up(b_min, bm)
        grid_m = b_p // bm

        x_p = jnp.pad(x.astype(f32), ((0, b_p - B), (0, in_p - IN)))

        w_bytes = 3 * in_p * out_p * w_item
        cost = pl.CostEstimate(
            flops=int(2 * 3 * b_p * in_p * out_p),            # 3-matmul decomposition
            transcendentals=int(2 * b_p * in_p),               # cos + sin
            bytes_accessed=int(b_p * in_p * 4
                               + w_bytes * (1 if single_k else grid_m)
                               + b_p * out_p * 4),
        )

        if single_k:
            grid = (grid_m,)
            in_specs = [
                pl.BlockSpec((bm, in_p), lambda m: (m, 0)),
                pl.BlockSpec((in_p, out_p), lambda m: (0, 0)),   # constant index ->
                pl.BlockSpec((in_p, out_p), lambda m: (0, 0)),   # weights DMAed once,
                pl.BlockSpec((in_p, out_p), lambda m: (0, 0)),   # stay VMEM-resident
            ]
            out_specs = pl.BlockSpec((bm, out_p), lambda m: (m, 0))
            scratch = []
            kernel = kernel_res
            dims = ("parallel",)
        else:
            grid = (grid_m, grid_k)
            in_specs = [
                pl.BlockSpec((bm, bk), lambda m, k: (m, k)),
                pl.BlockSpec((bk, out_p), lambda m, k: (k, 0)),
                pl.BlockSpec((bk, out_p), lambda m, k: (k, 0)),
                pl.BlockSpec((bk, out_p), lambda m, k: (k, 0)),
            ]
            out_specs = pl.BlockSpec((bm, out_p), lambda m, k: (m, 0))
            scratch = [pltpu.VMEM((bm, out_p), f32),    # yr accumulator
                       pltpu.VMEM((bm, out_p), f32)]    # yi accumulator
            kernel = kernel_til
            dims = ("parallel", "arbitrary")

        out_padded = pl.pallas_call(
            kernel,
            out_shape=jax.ShapeDtypeStruct((b_p, out_p), f32),
            grid_spec=pltpu.PrefetchScalarGridSpec(
                num_scalar_prefetch=0,
                grid=grid,
                in_specs=in_specs,
                out_specs=out_specs,
                scratch_shapes=scratch,
            ),
            compiler_params=pltpu.CompilerParams(
                dimension_semantics=dims,
                vmem_limit_bytes=vmem_budget,
            ),
            cost_estimate=cost,
        )(x_p, wr_c, ws_c, wd_c)

        return out_padded[:B, :OUT]

    return forward


def make_params(in_features, out_features, seed=42):
    """Deterministic synthetic transmission matrix (std = 1/sqrt(in_features))."""
    key = jax.random.PRNGKey(seed)
    kr, ki = jax.random.split(key)
    std = 1.0 / jnp.sqrt(jnp.float32(in_features))
    tm_real = std * jax.random.normal(kr, (in_features, out_features), jnp.float32)
    tm_imag = std * jax.random.normal(ki, (in_features, out_features), jnp.float32)
    return tm_real, tm_imag


def _reference(x, tm_real, tm_imag):
    xc = jnp.exp(1j * jnp.pi * x.astype(jnp.complex64))
    tm = (tm_real + 1j * tm_imag).astype(jnp.complex64)
    y = xc @ tm
    p = jnp.square(jnp.abs(y))
    return p / jnp.max(p, axis=1, keepdims=True)


if __name__ == "__main__":
    batch, in_features, out_features = 8, 32, 32

    key = jax.random.PRNGKey(0)
    x = jax.random.uniform(key, (batch, in_features), jnp.float32, -1.0, 1.0)
    tm_real, tm_imag = make_params(in_features, out_features)

    forward = make_blackbox_forward(tm_real, tm_imag)   # weights padded/cast once
    out = jax.block_until_ready(forward(x))

    ref = _reference(x, tm_real, tm_imag)
    assert out.shape == (batch, out_features)
    # bf16 MXU operands on a max-normalized intensity output -> percent-level tolerance.
    assert jnp.allclose(out, ref, atol=5e-2, rtol=5e-2)
    # Structural check: every row's maximum normalizes to ~1 (exact reciprocal path).
    assert jnp.allclose(jnp.max(out, axis=1), 1.0, atol=1e-3)

    print("KERNEL_OK")
</pallas_src>

<mosaic_0001>
module attributes {stable_mosaic.version = 11 : i64} {
  func.func @_blackbox_kernel_resident(%arg0: i32, %arg1: memref<8x128xf32, #tpu.memory_space<vmem>>, %arg2: memref<128x128xbf16, #tpu.memory_space<vmem>>, %arg3: memref<128x128xbf16, #tpu.memory_space<vmem>>, %arg4: memref<128x128xbf16, #tpu.memory_space<vmem>>, %arg5: memref<8x128xf32, #tpu.memory_space<vmem>>) attributes {dimension_semantics = [#tpu.dimension_semantics<parallel>], iteration_bounds = array<i64: 1>, scalar_prefetch = 0 : i64, scratch_operands = 0 : i64, tpu.core_type = #tpu.core_type<tc>, window_params = [{transform_indices = @transform_0, window_bounds = array<i64: 8, 128>}, {pipeline_mode = #tpu.pipeline_mode<synchronous>, transform_indices = @transform_1, window_bounds = array<i64: 128, 128>}, {pipeline_mode = #tpu.pipeline_mode<synchronous>, transform_indices = @transform_2, window_bounds = array<i64: 128, 128>}, {pipeline_mode = #tpu.pipeline_mode<synchronous>, transform_indices = @transform_3, window_bounds = array<i64: 128, 128>}, {transform_indices = @transform_4, window_bounds = array<i64: 8, 128>}]} {
    %c0 = arith.constant 0 : index
    %c0_0 = arith.constant 0 : index
    %0 = vector.load %arg1[%c0, %c0_0] : memref<8x128xf32, #tpu.memory_space<vmem>>, vector<8x128xf32>
    %cst = arith.constant 3.14159274 : f32
    %1 = vector.broadcast %cst : f32 to vector<8x128xf32>
    %2 = arith.mulf %1, %0 : vector<8x128xf32>
    %3 = math.cos %2 : vector<8x128xf32>
    %4 = math.sin %2 : vector<8x128xf32>
    %5 = arith.addf %3, %4 : vector<8x128xf32>
    %6 = arith.truncf %5 : vector<8x128xf32> to vector<8x128xbf16>
    %c0_1 = arith.constant 0 : index
    %c0_2 = arith.constant 0 : index
    %7 = vector.load %arg2[%c0_1, %c0_2] : memref<128x128xbf16, #tpu.memory_space<vmem>>, vector<128x128xbf16>
    %cst_3 = arith.constant dense<0.000000e+00> : vector<8x128xf32>
    %8 = tpu.matmul %6, %7, %cst_3 {dimension_numbers = #tpu.dot_dimension_numbers<[1], [0], [0], [1], [0, 0, 1, 1], [], []>} : vector<8x128xbf16>, vector<128x128xbf16>, vector<8x128xf32> -> vector<8x128xf32>
    %9 = arith.truncf %4 : vector<8x128xf32> to vector<8x128xbf16>
    %c0_4 = arith.constant 0 : index
    %c0_5 = arith.constant 0 : index
    %10 = vector.load %arg3[%c0_4, %c0_5] : memref<128x128xbf16, #tpu.memory_space<vmem>>, vector<128x128xbf16>
    %cst_6 = arith.constant dense<0.000000e+00> : vector<8x128xf32>
    %11 = tpu.matmul %9, %10, %cst_6 {dimension_numbers = #tpu.dot_dimension_numbers<[1], [0], [0], [1], [0, 0, 1, 1], [], []>} : vector<8x128xbf16>, vector<128x128xbf16>, vector<8x128xf32> -> vector<8x128xf32>
    %12 = arith.truncf %3 : vector<8x128xf32> to vector<8x128xbf16>
    %c0_7 = arith.constant 0 : index
    %c0_8 = arith.constant 0 : index
    %13 = vector.load %arg4[%c0_7, %c0_8] : memref<128x128xbf16, #tpu.memory_space<vmem>>, vector<128x128xbf16>
    %cst_9 = arith.constant dense<0.000000e+00> : vector<8x128xf32>
    %14 = tpu.matmul %12, %13, %cst_9 {dimension_numbers = #tpu.dot_dimension_numbers<[1], [0], [0], [1], [0, 0, 1, 1], [], []>} : vector<8x128xbf16>, vector<128x128xbf16>, vector<8x128xf32> -> vector<8x128xf32>
    %15 = arith.subf %8, %11 : vector<8x128xf32>
    %16 = arith.addf %8, %14 : vector<8x128xf32>
    %17 = arith.mulf %15, %15 : vector<8x128xf32>
    %18 = arith.mulf %16, %16 : vector<8x128xf32>
    %19 = arith.addf %17, %18 : vector<8x128xf32>
    %cst_10 = arith.constant dense<0xFF800000> : vector<8xf32>
    %20 = vector.multi_reduction <maximumf>, %19, %cst_10 [1] : vector<8x128xf32> to vector<8xf32>
    %21 = vector.shape_cast %20 : vector<8xf32> to vector<8x1xf32>
    %cst_11 = arith.constant 1.000000e-30 : f32
    %22 = vector.broadcast %cst_11 : f32 to vector<8x1xf32>
    %23 = arith.maximumf %21, %22 : vector<8x1xf32>
    %24 = tpu.reciprocal %23 : vector<8x1xf32> -> vector<8x1xf32>
    %25 = vector.broadcast %24 : vector<8x1xf32> to vector<8x128xf32>
    %26 = arith.mulf %19, %25 : vector<8x128xf32>
    %c0_12 = arith.constant 0 : index
    %c0_13 = arith.constant 0 : index
    %27 = vector.load %arg5[%c0_12, %c0_13] : memref<8x128xf32, #tpu.memory_space<vmem>>, vector<8x128xf32>
    tpu.vector_store %arg5[%c0_12, %c0_13], %26 {strides = array<i32>} : memref<8x128xf32, #tpu.memory_space<vmem>>, vector<8x128xf32>,
    return
  }
  func.func @transform_0(%arg0: i32) -> (i32, i32) {
    %c0_i32 = arith.constant 0 : i32
    %c0_i32_0 = arith.constant 0 : i32
    return %arg0, %c0_i32 : i32, i32
  }
  func.func @transform_1(%arg0: i32) -> (i32, i32) {
    %c0_i32 = arith.constant 0 : i32
    %c0_i32_0 = arith.constant 0 : i32
    %c0_i32_1 = arith.constant 0 : i32
    return %c0_i32, %c0_i32_0 : i32, i32
  }
  func.func @transform_2(%arg0: i32) -> (i32, i32) {
    %c0_i32 = arith.constant 0 : i32
    %c0_i32_0 = arith.constant 0 : i32
    %c0_i32_1 = arith.constant 0 : i32
    return %c0_i32, %c0_i32_0 : i32, i32
  }
  func.func @transform_3(%arg0: i32) -> (i32, i32) {
    %c0_i32 = arith.constant 0 : i32
    %c0_i32_0 = arith.constant 0 : i32
    %c0_i32_1 = arith.constant 0 : i32
    return %c0_i32, %c0_i32_0 : i32, i32
  }
  func.func @transform_4(%arg0: i32) -> (i32, i32) {
    %c0_i32 = arith.constant 0 : i32
    %c0_i32_0 = arith.constant 0 : i32
    return %arg0, %c0_i32 : i32, i32
  }
}

</mosaic_0001>

<llo_original>
// kernel: tpu_custom_call.1
$region0: #{tpu_custom_call.1}
  #allocation0 [shape = 'u32[]', space=smem, size = 0x4, offset = 0x4, fixed_abs, tag = 'smem constant byte address 0x4 - core index']
  #allocation1 [shape = 'u32[144,128]{1,0:T(1,128)}', space=vmem, size = 0x12000, scoped, tag = 'internal scratch']
  %s0 = inlined_call_operand.hbm [shape: f32[8,128], index: 0, kind: input, shape index: {}]
  %s1 = inlined_call_operand.hbm [shape: bf16[128,128], index: 1, kind: input, shape index: {}]
  %s2 = inlined_call_operand.hbm [shape: bf16[128,128], index: 2, kind: input, shape index: {}]
  %s3 = inlined_call_operand.hbm [shape: bf16[128,128], index: 3, kind: input, shape index: {}]
  %s4 = inlined_call_operand.hbm [shape: f32[8,128], index: 4, kind: output, shape index: {}]
  %s5 = sld [smem:[#allocation0]]
  $region42: #{tpu_custom_call.1} parent=0
    _
  %s7 = ssub.s32 1, %s5
  %s8 = scalar_select 0, %s7, %s5
  $region1: #{tpu_custom_call.1} parent=0
    #allocation2 [shape = 'u8[4096]{0}', space=vmem, size = 0x1000, scoped, tag = 'input window, operand 0, single buffered']
    #allocation3 [shape = 's32[1]{0}', space=sflag, size = 0x4, scoped, tag = 'scoped memory for tpu_custom_call.1']
    #allocation4 [shape = 's32[1]{0}', space=sflag, size = 0x4, scoped, tag = 'scoped memory for tpu_custom_call.1']
    #allocation5 [shape = 'u8[32768]{0}', space=vmem, size = 0x8000, scoped, tag = 'input window, operand 1, single buffered']
    #allocation6 [shape = 's32[1]{0}', space=sflag, size = 0x4, scoped, tag = 'scoped memory for tpu_custom_call.1']
    #allocation7 [shape = 'u8[32768]{0}', space=vmem, size = 0x8000, scoped, tag = 'input window, operand 2, single buffered']
    #allocation8 [shape = 'u8[32768]{0}', space=vmem, size = 0x8000, scoped, tag = 'input window, operand 3, single buffered']
    #allocation9 [shape = 's32[1]{0}', space=sflag, size = 0x4, scoped, tag = 'scoped memory for tpu_custom_call.1']
    #allocation10 [shape = 'u8[4096]{0}', space=vmem, size = 0x1000, scoped, tag = 'output window, operand 0, single buffered']
    %9 = vsyncpa [#allocation3], 0
    %10 = vsyncpa [#allocation6], 0
    %11 = vsyncpa [#allocation9], 0
    %12 = vsyncpa [#allocation4], 0
    // Predicated region
    $region2: #{tpu_custom_call.1} parent=1 // pred_check
      _
    $region3: #{tpu_custom_call.1} parent=1 // pred_check_branch
      %14 = sbr.rel (0) target = $region5
    $region4: #{tpu_custom_call.1} parent=1 // pred_region
      %s16 = ssub.s32 128, 128
      %17 = vsyncadd [#allocation3], %s16
      %s19 = sshll.u32 [#allocation2], 4
      %s20 = int_to_ptr.vmem [resolvable:$true] %s19
      %22 = dma.hbm_to_vmem [thread:$0]  %s0, 128, %s20, [#allocation3]
    $region5: #{tpu_custom_call.1} parent=1 // pred_fallthru
      _
    // Predicated region
    $region6: #{tpu_custom_call.1} parent=1 // pred_check
      _
    $region7: #{tpu_custom_call.1} parent=1 // pred_check_branch
      %24 = sbr.rel (0) target = $region9
    $region8: #{tpu_custom_call.1} parent=1 // pred_region
      %s26 = ssub.s32 1024, 1024
      %27 = vsyncadd [#allocation6], %s26
      %s28 = sshll.u32 [#allocation5], 4
      %s29 = int_to_ptr.vmem [resolvable:$true] %s28
      %34 = dma.hbm_to_vmem [thread:$0]  %s1, 1024, %s29, [#allocation6], 64, 64, 4
    $region9: #{tpu_custom_call.1} parent=1 // pred_fallthru
      _
    // Predicated region
    $region10: #{tpu_custom_call.1} parent=1 // pred_check
      _
    $region11: #{tpu_custom_call.1} parent=1 // pred_check_branch
      %36 = sbr.rel (0) target = $region13
    $region12: #{tpu_custom_call.1} parent=1 // pred_region
      %s38 = ssub.s32 1024, 1024
      %39 = vsyncadd [#allocation6], %s38
      %s40 = sshll.u32 [#allocation7], 4
      %s41 = int_to_ptr.vmem [resolvable:$true] %s40
      %46 = dma.hbm_to_vmem [thread:$0]  %s2, 1024, %s41, [#allocation6], 64, 64, 4
    $region13: #{tpu_custom_call.1} parent=1 // pred_fallthru
      _
    // Predicated region
    $region14: #{tpu_custom_call.1} parent=1 // pred_check
      _
    $region15: #{tpu_custom_call.1} parent=1 // pred_check_branch
      %48 = sbr.rel (0) target = $region17
    $region16: #{tpu_custom_call.1} parent=1 // pred_region
      %s50 = ssub.s32 1024, 1024
      %51 = vsyncadd [#allocation9], %s50
      %s52 = sshll.u32 [#allocation8], 4
      %s53 = int_to_ptr.vmem [resolvable:$true] %s52
      %58 = dma.hbm_to_vmem [thread:$0]  %s3, 1024, %s53, [#allocation9], 64, 64, 4
    $region17: #{tpu_custom_call.1} parent=1 // pred_fallthru
      _
    // Predicated region
    $region18: #{tpu_custom_call.1} parent=1 // pred_check
      _
    $region19: #{tpu_custom_call.1} parent=1 // pred_check_branch
      %60 = sbr.rel (0) target = $region21
    $region20: #{tpu_custom_call.1} parent=1 // pred_region
      %61 = dma.done [#allocation3], 128
    $region21: #{tpu_custom_call.1} parent=1 // pred_fallthru
      _
    // Predicated region
    $region22: #{tpu_custom_call.1} parent=1 // pred_check
      _
    $region23: #{tpu_custom_call.1} parent=1 // pred_check_branch
      %63 = sbr.rel (0) target = $region25
    $region24: #{tpu_custom_call.1} parent=1 // pred_region
      %64 = dma.done [#allocation6], 1024
    $region25: #{tpu_custom_call.1} parent=1 // pred_fallthru
      _
    // Predicated region
    $region26: #{tpu_custom_call.1} parent=1 // pred_check
      _
    $region27: #{tpu_custom_call.1} parent=1 // pred_check_branch
      %66 = sbr.rel (0) target = $region29
    $region28: #{tpu_custom_call.1} parent=1 // pred_region
      %67 = dma.done [#allocation6], 1024
    $region29: #{tpu_custom_call.1} parent=1 // pred_fallthru
      _
    // Predicated region
    $region30: #{tpu_custom_call.1} parent=1 // pred_check
      _
    $region31: #{tpu_custom_call.1} parent=1 // pred_check_branch
      %69 = sbr.rel (0) target = $region33
    $region32: #{tpu_custom_call.1} parent=1 // pred_region
      %70 = dma.done [#allocation9], 1024
    $region33: #{tpu_custom_call.1} parent=1 // pred_fallthru
      _
    %v72 = vld [vmem:[#allocation2] sm:$0xff]
    %v73 = vmul.f32 %v72, 3.1415927
    %v74 = vand.u32 2147483647, %v73
    %vm75 = vcmp.le.f32.partialorder %v74, 0.7853982
    %vm76 = vcmp.lt.s32.totalorder %v73, 0
    %v77 = vand.u32 %v73, 2139095040
    %v78 = vshrl.u32 %v77, 23
    %v79 = vsub.s32 %v78, 127
    %v80 = vand.u32 2147483647, %v73
    %v81 = vand.u32 %v80, 8388607
    %v82 = vor.u32 %v81, 8388608
    %v83 = vsub.s32 0, %v82
    %v84 = vadd.s32 %v79, 1
    %vm85 = vcmp.gt.s32.totalorder %v84, 0
    %v86 = vsel %vm85, %v84, 0
    %v87 = vshrl.u32 %v86, 5
    %v88 = vand.u32 %v86, 31
    %v89 = vsub.s32 32, %v88
    %v90 = vshrl.u32 683565275, %v89
    %v91 = vshll.u32 683565275, %v88
    %v92 = vshrl.u32 2475754826, %v89
    %v93 = vor.u32 %v91, %v92
    %v94 = vshll.u32 2475754826, %v88
    %v95 = vshrl.u32 2131351028, %v89
    %v96 = vor.u32 %v94, %v95
    %v97 = vshll.u32 2131351028, %v88
    %v98 = vshrl.u32 2102212464, %v89
    %v99 = vor.u32 %v97, %v98
    %v100 = vshll.u32 2102212464, %v88
    %v101 = vshrl.u32 920167782, %v89
    %v102 = vor.u32 %v100, %v101
    %v103 = vshll.u32 920167782, %v88
    %v104 = vshrl.u32 1326507024, %v89
    %v105 = vor.u32 %v103, %v104
    %vm106 = vcmp.lt.s32.totalorder %v87, 1
    %vm107 = vcmp.lt.s32.totalorder %v87, 2
    %vm108 = vcmp.lt.s32.totalorder %v87, 3
    %vm109 = vcmp.lt.s32.totalorder %v87, 4
    %v110 = vsel %vm106, %v90, %v93
    %v111 = vsel %vm109, %v99, 2102212464
    %v112 = vsel %vm108, %v96, %v111
    %v113 = vsel %vm107, %v110, %v112
    %v114 = vsel %vm106, %v93, %v96
    %v115 = vsel %vm109, %v102, 920167782
    %v116 = vsel %vm108, %v99, %v115
    %v117 = vsel %vm107, %v114, %v116
    %v118 = vsel %vm106, %v96, %v99
    %v119 = vsel %vm109, %v105, 1326507024
    %v120 = vsel %vm108, %v102, %v119
    %v121 = vsel %vm107, %v118, %v120
    %v122 = vshll.u32 %v82, 8
    %v123 = vmul.u32.u64.compose %v122, %v121
    %v124 = vextract.low.u32 %v123
    %v125 = vextract.high.u32 %v123
    %v126 = vmul.u32.u64.compose %v122, %v117
    %v127 = vextract.low.u32 %v126
    %v128 = vextract.high.u32 %v126
    %v129 = vmul.u32 %v122, %v113
    %v130 = vadd.s32 %v125, %v127
    %vm131 = vc.u32 %v125, %v127
    %v132 = vadd.s32 %v128, 1
    %v133 = vsel %vm131, %v132, %v128
    %v134 = vadd.s32 %v129, %v133
    %v135 = vadd.s32 %v134, 536870912
    %v136 = vshrl.u32 %v135, 30
    %v137 = vshll.u32 %v136, 30
    %v138 = vsub.s32 %v134, %v137
    %vm139 = vcmp.lt.s32.totalorder %v138, 0
    %v140 = vsub.s32 0, %v138
    %v141 = vsel %vm139, %v140, %v138
    %v142 = vclz %v141
    %v143 = vsub.s32 %v142, 2
    %vm144 = vcmp.gt.s32.totalorder 0, %v143
    %v145 = vsel %vm144, 0, %v143
    %v146 = vsub.s32 32, %v145
    %v147 = vshll.u32 %v138, %v145
    %v148 = vshrl.u32 %v130, %v146
    %v149 = vor.u32 %v147, %v148
    %v150 = vsub.s32 4294967266, %v145
    %v151 = vadd.s32 %v150, 127
    %v152 = vshll.u32 %v151, 23
    %v153 = vor.u32 4788187, %v152
    %v154 = vand.u32 2147483647, %v153
    %v156 = vcvt.s32.f32 %v149
    %v157 = vmul.f32 %v156, %v154
    %v158 = vxor.u32 %v157, 2147483648
    %v159 = vsel %vm76, %v158, %v157
    %v160 = vsub.s32 4, %v136
    %v161 = vsel %vm76, %v160, %v136
    %v162 = vsel %vm75, %v73, %v159
    %v163 = vsel %vm75, 0, %v161
    %v164 = vcosq.f32.pop %v162
    %v165 = vsinq.f32.pop %v162
    %vm166 = vweird.f32 %v73
    %v167 = vand.u32 %v163, 3
    %vm168 = vcmp.lt.s32.totalorder %v167, 2
    %vm169 = vcmp.eq.s32.totalorder %v167, 0
    %v170 = vxor.u32 %v165, 2147483648
    %v171 = vsel %vm169, %v164, %v170
    %vm172 = vcmp.eq.s32.totalorder %v167, 2
    %v173 = vxor.u32 %v164, 2147483648
    %v174 = vsel %vm172, %v173, %v165
    %v175 = vsel %vm168, %v171, %v174
    %v176 = vsel %vm166, nan, %v175
    %v177 = vand.u32 2147483647, %v73
    %vm178 = vcmp.le.f32.partialorder %v177, 0.7853982
    %vm179 = vcmp.lt.s32.totalorder %v73, 0
    %v180 = vand.u32 %v73, 2139095040
    %v181 = vshrl.u32 %v180, 23
    %v182 = vsub.s32 %v181, 127
    %v183 = vand.u32 2147483647, %v73
    %v184 = vand.u32 %v183, 8388607
    %v185 = vor.u32 %v184, 8388608
    %v186 = vsub.s32 0, %v185
    %v187 = vadd.s32 %v182, 1
    %vm188 = vcmp.gt.s32.totalorder %v187, 0
    %v189 = vsel %vm188, %v187, 0
    %v190 = vshrl.u32 %v189, 5
    %v191 = vand.u32 %v189, 31
    %v192 = vsub.s32 32, %v191
    %v193 = vshrl.u32 683565275, %v192
    %v194 = vshll.u32 683565275, %v191
    %v195 = vshrl.u32 2475754826, %v192
    %v196 = vor.u32 %v194, %v195
    %v197 = vshll.u32 2475754826, %v191
    %v198 = vshrl.u32 2131351028, %v192
    %v199 = vor.u32 %v197, %v198
    %v200 = vshll.u32 2131351028, %v191
    %v201 = vshrl.u32 2102212464, %v192
    %v202 = vor.u32 %v200, %v201
    %v203 = vshll.u32 2102212464, %v191
    %v204 = vshrl.u32 920167782, %v192
    %v205 = vor.u32 %v203, %v204
    %v206 = vshll.u32 920167782, %v191
    %v207 = vshrl.u32 1326507024, %v192
    %v208 = vor.u32 %v206, %v207
    %vm209 = vcmp.lt.s32.totalorder %v190, 1
    %vm210 = vcmp.lt.s32.totalorder %v190, 2
    %vm211 = vcmp.lt.s32.totalorder %v190, 3
    %vm212 = vcmp.lt.s32.totalorder %v190, 4
    %v213 = vsel %vm209, %v193, %v196
    %v214 = vsel %vm212, %v202, 2102212464
    %v215 = vsel %vm211, %v199, %v214
    %v216 = vsel %vm210, %v213, %v215
    %v217 = vsel %vm209, %v196, %v199
    %v218 = vsel %vm212, %v205, 920167782
    %v219 = vsel %vm211, %v202, %v218
    %v220 = vsel %vm210, %v217, %v219
    %v221 = vsel %vm209, %v199, %v202
    %v222 = vsel %vm212, %v208, 1326507024
    %v223 = vsel %vm211, %v205, %v222
    %v224 = vsel %vm210, %v221, %v223
    %v225 = vshll.u32 %v185, 8
    %v226 = vmul.u32.u64.compose %v225, %v224
    %v227 = vextract.low.u32 %v226
    %v228 = vextract.high.u32 %v226
    %v229 = vmul.u32.u64.compose %v225, %v220
    %v230 = vextract.low.u32 %v229
    %v231 = vextract.high.u32 %v229
    %v232 = vmul.u32 %v225, %v216
    %v233 = vadd.s32 %v228, %v230
    %vm234 = vc.u32 %v228, %v230
    %v235 = vadd.s32 %v231, 1
    %v236 = vsel %vm234, %v235, %v231
    %v237 = vadd.s32 %v232, %v236
    %v238 = vadd.s32 %v237, 536870912
    %v239 = vshrl.u32 %v238, 30
    %v240 = vshll.u32 %v239, 30
    %v241 = vsub.s32 %v237, %v240
    %vm242 = vcmp.lt.s32.totalorder %v241, 0
    %v243 = vsub.s32 0, %v241
    %v244 = vsel %vm242, %v243, %v241
    %v245 = vclz %v244
    %v246 = vsub.s32 %v245, 2
    %vm247 = vcmp.gt.s32.totalorder 0, %v246
    %v248 = vsel %vm247, 0, %v246
    %v249 = vsub.s32 32, %v248
    %v250 = vshll.u32 %v241, %v248
    %v251 = vshrl.u32 %v233, %v249
    %v252 = vor.u32 %v250, %v251
    %v253 = vsub.s32 4294967266, %v248
    %v254 = vadd.s32 %v253, 127
    %v255 = vshll.u32 %v254, 23
    %v256 = vor.u32 4788187, %v255
    %v257 = vand.u32 2147483647, %v256
    %v259 = vcvt.s32.f32 %v252
    %v260 = vmul.f32 %v259, %v257
    %v261 = vxor.u32 %v260, 2147483648
    %v262 = vsel %vm179, %v261, %v260
    %v263 = vsub.s32 4, %v239
    %v264 = vsel %vm179, %v263, %v239
    %v265 = vsel %vm178, %v73, %v262
    %v266 = vsel %vm178, 0, %v264
    %v267 = vcosq.f32.pop %v265
    %v268 = vsinq.f32.pop %v265
    %vm269 = vweird.f32 %v73
    %v270 = vadd.s32 %v266, 3
    %v271 = vand.u32 %v270, 3
    %vm272 = vcmp.lt.s32.totalorder %v271, 2
    %vm273 = vcmp.eq.s32.totalorder %v271, 0
    %v274 = vxor.u32 %v268, 2147483648
    %v275 = vsel %vm273, %v267, %v274
    %vm276 = vcmp.eq.s32.totalorder %v271, 2
    %v277 = vxor.u32 %v267, 2147483648
    %v278 = vsel %vm276, %v277, %v268
    %v279 = vsel %vm272, %v275, %v278
    %v280 = vsel %vm269, nan, %v279
    %v281 = vadd.f32 %v176, %v280
    %v282 = vpack.c.bf16 %v281, %v281
    %v283 = vld [vmem:[#allocation5] sm:$0xf]
    %v284 = vld [vmem:[#allocation5 + $0x4] sm:$0xf]
    %v285 = vld [vmem:[#allocation5 + $0x8] sm:$0xf]
    %v286 = vld [vmem:[#allocation5 + $0xc] sm:$0xf]
    %v287 = vld [vmem:[#allocation5 + $0x10] sm:$0xf]
    %v288 = vld [vmem:[#allocation5 + $0x14] sm:$0xf]
    %v289 = vld [vmem:[#allocation5 + $0x18] sm:$0xf]
    %v290 = vld [vmem:[#allocation5 + $0x1c] sm:$0xf]
    %v291 = vld [vmem:[#allocation5 + $0x20] sm:$0xf]
    %v292 = vld [vmem:[#allocation5 + $0x24] sm:$0xf]
    %v293 = vld [vmem:[#allocation5 + $0x28] sm:$0xf]
    %v294 = vld [vmem:[#allocation5 + $0x2c] sm:$0xf]
    %v295 = vld [vmem:[#allocation5 + $0x30] sm:$0xf]
    %v296 = vld [vmem:[#allocation5 + $0x34] sm:$0xf]
    %v297 = vld [vmem:[#allocation5 + $0x38] sm:$0xf]
    %v298 = vld [vmem:[#allocation5 + $0x3c] sm:$0xf]
    %v315 = vunpack.c.l.b16 %v283
    %v316 = vunpack.c.l.b16 %v284
    %v317 = vunpack.c.l.b16 %v285
    %v318 = vunpack.c.l.b16 %v286
    %v319 = vunpack.c.l.b16 %v287
    %v320 = vunpack.c.l.b16 %v288
    %v321 = vunpack.c.l.b16 %v289
    %v322 = vunpack.c.l.b16 %v290
    %v323 = vunpack.c.l.b16 %v291
    %v324 = vunpack.c.l.b16 %v292
    %v325 = vunpack.c.l.b16 %v293
    %v326 = vunpack.c.l.b16 %v294
    %v327 = vunpack.c.l.b16 %v295
    %v328 = vunpack.c.l.b16 %v296
    %v329 = vunpack.c.l.b16 %v297
    %v330 = vunpack.c.l.b16 %v298
    %v331 = vpack.c.b16 %v316, %v315
    %v332 = vpack.c.b16 %v318, %v317
    %v333 = vpack.c.b16 %v320, %v319
    %v334 = vpack.c.b16 %v322, %v321
    %v335 = vpack.c.b16 %v324, %v323
    %v336 = vpack.c.b16 %v326, %v325
    %v337 = vpack.c.b16 %v328, %v327
    %v338 = vpack.c.b16 %v330, %v329
    %347 = vmatprep.subr.bf16.mxu0 0
    %348 = vmatpush1.bf16.msra.mxu0 %v338
    %349 = vmatprep.subr.bf16.mxu0 0
    %350 = vmatpush1.bf16.msra.mxu0 %v337
    %351 = vmatprep.subr.bf16.mxu0 0
    %352 = vmatpush1.bf16.msra.mxu0 %v336
    %353 = vmatprep.subr.bf16.mxu0 0
    %354 = vmatpush1.bf16.msra.mxu0 %v335
    %355 = vmatprep.subr.bf16.mxu0 0
    %356 = vmatpush1.bf16.msra.mxu0 %v334
    %357 = vmatprep.subr.bf16.mxu0 0
    %358 = vmatpush1.bf16.msra.mxu0 %v333
    %359 = vmatprep.subr.bf16.mxu0 0
    %360 = vmatpush1.bf16.msra.mxu0 %v332
    %361 = vmatprep.subr.bf16.mxu0 0
    %362 = vmatpush1.bf16.msra.mxu0 %v331
    %363 = vmatprep.subr.bf16.mxu0 0
    %364 = vmatpush2.bf16.msra.mxu0 0
    %365 = vmatprep.subr.bf16.mxu0 0
    %366 = vmatpush2.bf16.msra.mxu0 0
    %367 = vmatprep.subr.bf16.mxu0 0
    %368 = vmatpush2.bf16.msra.mxu0 0
    %369 = vmatprep.subr.bf16.mxu0 0
    %370 = vmatpush2.bf16.msra.mxu0 0
    %371 = vmatprep.subr.bf16.mxu0 0
    %372 = vmatpush2.bf16.msra.mxu0 0
    %373 = vmatprep.subr.bf16.mxu0 0
    %374 = vmatpush2.bf16.msra.mxu0 0
    %375 = vmatprep.subr.bf16.mxu0 0
    %376 = vmatpush2.bf16.msra.mxu0 0
    %377 = vmatprep.subr.bf16.mxu0 0
    %378 = vmatpush2.bf16.msra.mxu0 0
    %379 = vmatprep.mubr.bf16.mxu0 0
    %380 = vmatmul.mubr.bf16.gmra.mxu0 %v282
    %v381 = vpop.f32.mrf.mxu0
    %v382 = vadd.f32 0.0, %v381
    %v383 = vpop.f32.mrf.mxu0
    %v384 = vpop.f32.mrf.mxu0
    %v385 = vpop.f32.mrf.mxu0
    %386 = vdwg.mxu0
    %v387 = vpack.c.bf16 %v280, %v280
    %v388 = vld [vmem:[#allocation7] sm:$0xf]
    %v389 = vld [vmem:[#allocation7 + $0x4] sm:$0xf]
    %v390 = vld [vmem:[#allocation7 + $0x8] sm:$0xf]
    %v391 = vld [vmem:[#allocation7 + $0xc] sm:$0xf]
    %v392 = vld [vmem:[#allocation7 + $0x10] sm:$0xf]
    %v393 = vld [vmem:[#allocation7 + $0x14] sm:$0xf]
    %v394 = vld [vmem:[#allocation7 + $0x18] sm:$0xf]
    %v395 = vld [vmem:[#allocation7 + $0x1c] sm:$0xf]
    %v396 = vld [vmem:[#allocation7 + $0x20] sm:$0xf]
    %v397 = vld [vmem:[#allocation7 + $0x24] sm:$0xf]
    %v398 = vld [vmem:[#allocation7 + $0x28] sm:$0xf]
    %v399 = vld [vmem:[#allocation7 + $0x2c] sm:$0xf]
    %v400 = vld [vmem:[#allocation7 + $0x30] sm:$0xf]
    %v401 = vld [vmem:[#allocation7 + $0x34] sm:$0xf]
    %v402 = vld [vmem:[#allocation7 + $0x38] sm:$0xf]
    %v403 = vld [vmem:[#allocation7 + $0x3c] sm:$0xf]
    %v420 = vunpack.c.l.b16 %v388
    %v421 = vunpack.c.l.b16 %v389
    %v422 = vunpack.c.l.b16 %v390
    %v423 = vunpack.c.l.b16 %v391
    %v424 = vunpack.c.l.b16 %v392
    %v425 = vunpack.c.l.b16 %v393
    %v426 = vunpack.c.l.b16 %v394
    %v427 = vunpack.c.l.b16 %v395
    %v428 = vunpack.c.l.b16 %v396
    %v429 = vunpack.c.l.b16 %v397
    %v430 = vunpack.c.l.b16 %v398
    %v431 = vunpack.c.l.b16 %v399
    %v432 = vunpack.c.l.b16 %v400
    %v433 = vunpack.c.l.b16 %v401
    %v434 = vunpack.c.l.b16 %v402
    %v435 = vunpack.c.l.b16 %v403
    %v436 = vpack.c.b16 %v421, %v420
    %v437 = vpack.c.b16 %v423, %v422
    %v438 = vpack.c.b16 %v425, %v424
    %v439 = vpack.c.b16 %v427, %v426
    %v440 = vpack.c.b16 %v429, %v428
    %v441 = vpack.c.b16 %v431, %v430
    %v442 = vpack.c.b16 %v433, %v432
    %v443 = vpack.c.b16 %v435, %v434
    %452 = vmatprep.subr.bf16.mxu0 0
    %453 = vmatpush1.bf16.msra.mxu0 %v443
    %454 = vmatprep.subr.bf16.mxu0 0
    %455 = vmatpush1.bf16.msra.mxu0 %v442
    %456 = vmatprep.subr.bf16.mxu0 0
    %457 = vmatpush1.bf16.msra.mxu0 %v441
    %458 = vmatprep.subr.bf16.mxu0 0
    %459 = vmatpush1.bf16.msra.mxu0 %v440
    %460 = vmatprep.subr.bf16.mxu0 0
    %461 = vmatpush1.bf16.msra.mxu0 %v439
    %462 = vmatprep.subr.bf16.mxu0 0
    %463 = vmatpush1.bf16.msra.mxu0 %v438
    %464 = vmatprep.subr.bf16.mxu0 0
    %465 = vmatpush1.bf16.msra.mxu0 %v437
    %466 = vmatprep.subr.bf16.mxu0 0
    %467 = vmatpush1.bf16.msra.mxu0 %v436
    %468 = vmatprep.subr.bf16.mxu0 0
    %469 = vmatpush2.bf16.msra.mxu0 0
    %470 = vmatprep.subr.bf16.mxu0 0
    %471 = vmatpush2.bf16.msra.mxu0 0
    %472 = vmatprep.subr.bf16.mxu0 0
    %473 = vmatpush2.bf16.msra.mxu0 0
    %474 = vmatprep.subr.bf16.mxu0 0
    %475 = vmatpush2.bf16.msra.mxu0 0
    %476 = vmatprep.subr.bf16.mxu0 0
    %477 = vmatpush2.bf16.msra.mxu0 0
    %478 = vmatprep.subr.bf16.mxu0 0
    %479 = vmatpush2.bf16.msra.mxu0 0
    %480 = vmatprep.subr.bf16.mxu0 0
    %481 = vmatpush2.bf16.msra.mxu0 0
    %482 = vmatprep.subr.bf16.mxu0 0
    %483 = vmatpush2.bf16.msra.mxu0 0
    %484 = vmatprep.mubr.bf16.mxu0 0
    %485 = vmatmul.mubr.bf16.gmra.mxu0 %v387
    %v486 = vpop.f32.mrf.mxu0
    %v487 = vadd.f32 0.0, %v486
    %v488 = vpop.f32.mrf.mxu0
    %v489 = vpop.f32.mrf.mxu0
    %v490 = vpop.f32.mrf.mxu0
    %491 = vdwg.mxu0
    %v492 = vpack.c.bf16 %v176, %v176
    %v493 = vld [vmem:[#allocation8] sm:$0xf]
    %v494 = vld [vmem:[#allocation8 + $0x4] sm:$0xf]
    %v495 = vld [vmem:[#allocation8 + $0x8] sm:$0xf]
    %v496 = vld [vmem:[#allocation8 + $0xc] sm:$0xf]
    %v497 = vld [vmem:[#allocation8 + $0x10] sm:$0xf]
    %v498 = vld [vmem:[#allocation8 + $0x14] sm:$0xf]
    %v499 = vld [vmem:[#allocation8 + $0x18] sm:$0xf]
    %v500 = vld [vmem:[#allocation8 + $0x1c] sm:$0xf]
    %v501 = vld [vmem:[#allocation8 + $0x20] sm:$0xf]
    %v502 = vld [vmem:[#allocation8 + $0x24] sm:$0xf]
    %v503 = vld [vmem:[#allocation8 + $0x28] sm:$0xf]
    %v504 = vld [vmem:[#allocation8 + $0x2c] sm:$0xf]
    %v505 = vld [vmem:[#allocation8 + $0x30] sm:$0xf]
    %v506 = vld [vmem:[#allocation8 + $0x34] sm:$0xf]
    %v507 = vld [vmem:[#allocation8 + $0x38] sm:$0xf]
    %v508 = vld [vmem:[#allocation8 + $0x3c] sm:$0xf]
    %v525 = vunpack.c.l.b16 %v493
    %v526 = vunpack.c.l.b16 %v494
    %v527 = vunpack.c.l.b16 %v495
    %v528 = vunpack.c.l.b16 %v496
    %v529 = vunpack.c.l.b16 %v497
    %v530 = vunpack.c.l.b16 %v498
    %v531 = vunpack.c.l.b16 %v499
    %v532 = vunpack.c.l.b16 %v500
    %v533 = vunpack.c.l.b16 %v501
    %v534 = vunpack.c.l.b16 %v502
    %v535 = vunpack.c.l.b16 %v503
    %v536 = vunpack.c.l.b16 %v504
    %v537 = vunpack.c.l.b16 %v505
    %v538 = vunpack.c.l.b16 %v506
    %v539 = vunpack.c.l.b16 %v507
    %v540 = vunpack.c.l.b16 %v508
    %v541 = vpack.c.b16 %v526, %v525
    %v542 = vpack.c.b16 %v528, %v527
    %v543 = vpack.c.b16 %v530, %v529
    %v544 = vpack.c.b16 %v532, %v531
    %v545 = vpack.c.b16 %v534, %v533
    %v546 = vpack.c.b16 %v536, %v535
    %v547 = vpack.c.b16 %v538, %v537
    %v548 = vpack.c.b16 %v540, %v539
    %557 = vmatprep.subr.bf16.mxu0 0
    %558 = vmatpush1.bf16.msra.mxu0 %v548
    %559 = vmatprep.subr.bf16.mxu0 0
    %560 = vmatpush1.bf16.msra.mxu0 %v547
    %561 = vmatprep.subr.bf16.mxu0 0
    %562 = vmatpush1.bf16.msra.mxu0 %v546
    %563 = vmatprep.subr.bf16.mxu0 0
    %564 = vmatpush1.bf16.msra.mxu0 %v545
    %565 = vmatprep.subr.bf16.mxu0 0
    %566 = vmatpush1.bf16.msra.mxu0 %v544
    %567 = vmatprep.subr.bf16.mxu0 0
    %568 = vmatpush1.bf16.msra.mxu0 %v543
    %569 = vmatprep.subr.bf16.mxu0 0
    %570 = vmatpush1.bf16.msra.mxu0 %v542
    %571 = vmatprep.subr.bf16.mxu0 0
    %572 = vmatpush1.bf16.msra.mxu0 %v541
    %573 = vmatprep.subr.bf16.mxu0 0
    %574 = vmatpush2.bf16.msra.mxu0 0
    %575 = vmatprep.subr.bf16.mxu0 0
    %576 = vmatpush2.bf16.msra.mxu0 0
    %577 = vmatprep.subr.bf16.mxu0 0
    %578 = vmatpush2.bf16.msra.mxu0 0
    %579 = vmatprep.subr.bf16.mxu0 0
    %580 = vmatpush2.bf16.msra.mxu0 0
    %581 = vmatprep.subr.bf16.mxu0 0
    %582 = vmatpush2.bf16.msra.mxu0 0
    %583 = vmatprep.subr.bf16.mxu0 0
    %584 = vmatpush2.bf16.msra.mxu0 0
    %585 = vmatprep.subr.bf16.mxu0 0
    %586 = vmatpush2.bf16.msra.mxu0 0
    %587 = vmatprep.subr.bf16.mxu0 0
    %588 = vmatpush2.bf16.msra.mxu0 0
    %589 = vmatprep.mubr.bf16.mxu0 0
    %590 = vmatmul.mubr.bf16.gmra.mxu0 %v492
    %v591 = vpop.f32.mrf.mxu0
    %v592 = vadd.f32 0.0, %v591
    %v593 = vpop.f32.mrf.mxu0
    %v594 = vpop.f32.mrf.mxu0
    %v595 = vpop.f32.mrf.mxu0
    %596 = vdwg.mxu0
    %v597 = vsub.f32 %v382, %v487
    %v598 = vadd.f32 %v382, %v592
    %v599 = vmul.f32 %v597, %v597
    %v600 = vmul.f32 %v598, %v598
    %v601 = vadd.f32 %v599, %v600
    %602 = vmax.xlane.f32.xlu0 %v601
    %v603 = vpop.xlane.xlu0 %602
    %v604 = vmax.f32 %v603, 1e-30
    %v605 = vrcp.pop %v604
    %v606 = vmul.f32 %v601, %v605
    %607 = vst [vmem:[#allocation10] sm:$0xff] %v606
    // Predicated region
    $region34: #{tpu_custom_call.1} parent=1 // pred_check
      _
    $region35: #{tpu_custom_call.1} parent=1 // pred_check_branch
      %609 = sbr.rel (0) target = $region37
    $region36: #{tpu_custom_call.1} parent=1 // pred_region
      %s611 = ssub.s32 128, 128
      %612 = vsyncadd [#allocation4], %s611
      %s614 = sshll.u32 [#allocation10], 4
      %s615 = int_to_ptr.vmem [resolvable:$true] %s614
      %617 = dma.vmem_to_hbm [thread:$0]  %s615, 128, %s4, [#allocation4]
    $region37: #{tpu_custom_call.1} parent=1 // pred_fallthru
      _
    // Predicated region
    $region38: #{tpu_custom_call.1} parent=1 // pred_check
      _
    $region39: #{tpu_custom_call.1} parent=1 // pred_check_branch
      %619 = sbr.rel (0) target = $region41
    $region40: #{tpu_custom_call.1} parent=1 // pred_region
      %620 = dma.done [#allocation4], 128
    $region41: #{tpu_custom_call.1} parent=1 // pred_fallthru
      _
    %621 = vsyncpa [#allocation3], 1
    %622 = vsyncpa [#allocation6], 1
    %623 = vsyncpa [#allocation9], 1
    %624 = vsyncpa [#allocation4], 1

</llo_original>
